<compile_context>
chip_gen: v7x
topology: tpu7x:2x2x1
jax: 0.10.0
libtpu: 0.0.40
codegen_flags: <defaults>
</compile_context>

<pallas_src>
import jax
import jax.numpy as jnp
from jax.experimental import pallas as pl
from jax.experimental.pallas import tpu as pltpu

IN_CHANNEL = 5
OUT_CHANNEL = 1
KERNEL_SIZE = 5
PADDING = 2
STRIDE = 1
N = 200          # sequence length / linear width
LANE = 256       # lane-padded width (multiple of 128)


def _round_up(x, m):
    return ((x + m - 1) // m) * m


def _model_kernel(x_ref, wconv_ref, wlin_ref, blin_ref, out_ref):
    # x_ref    : (C_in, TB, LANE)  VMEM  per-channel batch slabs; signal left-padded
    #                                    by PADDING zeros, right-padded to LANE
    # wconv_ref: (C_in*K,)         SMEM  conv taps, row-major (c, k)
    # wlin_ref : (LANE, LANE)      VMEM  pre-transposed, zero-padded linear weight
    # blin_ref : (1, LANE)         VMEM  zero-padded linear bias
    # out_ref  : (TB, LANE)        VMEM
    lane = out_ref.shape[-1]

    # ---- Conv1d (out_channel=1), tap-major ------------------------------------
    # s_k[b, l] = sum_c w[c, k] * x[c, b, l]  : 25 scalar-weighted VPU MACs on
    # unshifted (TB, LANE) slabs; accumulators initialized from channel 0 (no
    # zero-fill pass).
    x0 = x_ref[0]                                            # (TB, LANE)
    s = [x0 * wconv_ref[k] for k in range(KERNEL_SIZE)]
    for c in range(1, IN_CHANNEL):
        xc = x_ref[c]                                        # (TB, LANE)
        for k in range(KERNEL_SIZE):
            s[k] = s[k] + xc * wconv_ref[c * KERNEL_SIZE + k]

    # acc[b, l] = sum_k s_k[b, l + k]  -> only 4 lane rotations (XLU) per tile.
    # Wrap-around only pollutes lanes >= LANE-4 >= N, which are discarded by the
    # zero rows of the padded linear weight + the wrapper's [:N] slice.
    acc = s[0]
    for k in range(1, KERNEL_SIZE):
        acc = acc + pltpu.roll(s[k], shift=lane - k, axis=1)

    # ---- Tanh (EUP) ------------------------------------------------------------
    t = jnp.tanh(acc)                                        # (TB, LANE) f32

    # ---- Linear: y = t @ W^T + b (MXU; RHS consumed in stored layout) ----------
    y = jnp.dot(t, wlin_ref[...], preferred_element_type=jnp.float32)
    out_ref[...] = (y + blin_ref[...]).astype(out_ref.dtype)


def build_model_forward(x, w_conv, w_lin, b_lin):
    """x: (B, IN_CHANNEL, N) f32 -> (B, OUT_CHANNEL, N) f32 (PyTorch semantics)."""
    B = x.shape[0]
    TB = min(_round_up(B, 8), 512)          # batch tile (sublane-aligned)
    # If a large batch would give a single grid step, split it so >=2 "parallel"
    # steps exist (lets both v7x TensorCores engage); small batches stay 1-step.
    if TB >= 128 and _round_up(B, TB) == TB:
        TB = _round_up(TB // 2, 8)
    B_pad = _round_up(B, TB)

    # ---- layout glue (fused into the pallas_call input DMA via allow_input_fusion)
    # per-channel slabs (C, B_pad, LANE); the conv's zero padding (=2) is folded in.
    x_t = jnp.transpose(x, (1, 0, 2))                       # (C, B, N)
    x_slab = jnp.pad(
        x_t, ((0, 0), (0, B_pad - B), (PADDING, LANE - N - PADDING)))
    # conv taps, flat (c, k) row-major -> SMEM scalars
    w_conv_flat = w_conv.reshape(IN_CHANNEL * KERNEL_SIZE)
    # pre-transposed + zero-padded linear weight: Wt[k, j] = W[j, k]
    w_lin_t = jnp.pad(w_lin.T, ((0, LANE - N), (0, LANE - N)))
    b_lin_p = jnp.pad(b_lin.reshape(1, N), ((0, 0), (0, LANE - N)))

    cost = pl.CostEstimate(
        flops=2 * B_pad * LANE * LANE
        + 2 * B_pad * LANE * IN_CHANNEL * KERNEL_SIZE,
        transcendentals=B_pad * LANE,
        bytes_accessed=4 * (x_slab.size + w_lin_t.size + b_lin_p.size
                            + B_pad * LANE),
    )

    out = pl.pallas_call(
        _model_kernel,
        out_shape=jax.ShapeDtypeStruct((B_pad, LANE), jnp.float32),
        grid=(B_pad // TB,),
        in_specs=[
            pl.BlockSpec((IN_CHANNEL, TB, LANE), lambda i: (0, i, 0)),
            pl.BlockSpec(memory_space=pltpu.MemorySpace.SMEM),       # conv taps
            pl.BlockSpec((LANE, LANE), lambda i: (0, 0)),            # weight resident
            pl.BlockSpec((1, LANE), lambda i: (0, 0)),               # bias resident
        ],
        out_specs=pl.BlockSpec((TB, LANE), lambda i: (i, 0)),
        compiler_params=pltpu.CompilerParams(
            dimension_semantics=("parallel",),      # shards batch across v7x's 2 TCs
            allow_input_fusion=[True, False, False, False],  # fuse x transpose/pad
        ),
        cost_estimate=cost,
    )(x_slab, w_conv_flat, w_lin_t, b_lin_p)

    # slice away batch / lane padding, restore PyTorch (B, out_channel=1, N)
    return out[:B, :N][:, None, :]


build_model_forward_jit = jax.jit(build_model_forward)


if __name__ == "__main__":
    key = jax.random.PRNGKey(0)
    k_x, k_wc, k_wl, k_bl = jax.random.split(key, 4)

    B = 2
    x = jax.random.normal(k_x, (B, IN_CHANNEL, N), dtype=jnp.float32)

    # deterministic parameters (shapes from nn.Conv1d / nn.Linear)
    w_conv = 0.1 * jax.random.normal(
        k_wc, (OUT_CHANNEL, IN_CHANNEL, KERNEL_SIZE), dtype=jnp.float32)
    w_lin = 0.05 * jax.random.normal(k_wl, (N, N), dtype=jnp.float32)
    b_lin = 0.01 * jax.random.normal(k_bl, (N,), dtype=jnp.float32)

    out = build_model_forward_jit(x, w_conv, w_lin, b_lin)
    jax.block_until_ready(out)

    # plain-JAX reference of the same math (PyTorch forward)
    x_pad = jnp.pad(x, ((0, 0), (0, 0), (PADDING, PADDING)))
    conv_ref = jnp.zeros((B, N), dtype=jnp.float32)
    for k in range(KERNEL_SIZE):
        conv_ref = conv_ref + jnp.sum(
            x_pad[:, :, k:k + N] * w_conv[0, :, k][None, :, None], axis=1)
    ref = jnp.tanh(conv_ref) @ w_lin.T + b_lin
    ref = ref[:, None, :]

    assert out.shape == (B, OUT_CHANNEL, N)
    assert jnp.allclose(out, ref, atol=1e-4, rtol=1e-4), \
        float(jnp.max(jnp.abs(out - ref)))

    print("KERNEL_OK")
</pallas_src>

<mosaic_0001>
module attributes {stable_mosaic.version = 11 : i64} {
  func.func @_model_kernel(%arg0: i32, %arg1: memref<5x8x256xf32, #tpu.memory_space<vmem>>, %arg2: memref<25xf32, #tpu.memory_space<smem>>, %arg3: memref<256x256xf32, #tpu.memory_space<vmem>>, %arg4: memref<1x256xf32, #tpu.memory_space<vmem>>, %arg5: memref<8x256xf32, #tpu.memory_space<vmem>>) attributes {dimension_semantics = [#tpu.dimension_semantics<parallel>], iteration_bounds = array<i64: 1>, scalar_prefetch = 0 : i64, scratch_operands = 0 : i64, tpu.core_type = #tpu.core_type<tc>, window_params = [{transform_indices = @transform_0, window_bounds = array<i64: 5, 8, 256>}, {transform_indices = @transform_1, window_bounds = array<i64: 25>}, {pipeline_mode = #tpu.pipeline_mode<synchronous>, transform_indices = @transform_2, window_bounds = array<i64: 256, 256>}, {pipeline_mode = #tpu.pipeline_mode<synchronous>, transform_indices = @transform_3, window_bounds = array<i64: 1, 256>}, {transform_indices = @transform_4, window_bounds = array<i64: 8, 256>}]} {
    %c0 = arith.constant 0 : index
    %c0_0 = arith.constant 0 : index
    %c0_1 = arith.constant 0 : index
    %0 = vector.load %arg1[%c0, %c0_0, %c0_1] : memref<5x8x256xf32, #tpu.memory_space<vmem>>, vector<1x8x256xf32>
    %1 = vector.shape_cast %0 : vector<1x8x256xf32> to vector<8x256xf32>
    %c0_2 = arith.constant 0 : index
    %2 = memref.load %arg2[%c0_2] : memref<25xf32, #tpu.memory_space<smem>>
    %3 = vector.broadcast %2 : f32 to vector<8x256xf32>
    %4 = arith.mulf %1, %3 : vector<8x256xf32>
    %c1 = arith.constant 1 : index
    %5 = memref.load %arg2[%c1] : memref<25xf32, #tpu.memory_space<smem>>
    %6 = vector.broadcast %5 : f32 to vector<8x256xf32>
    %7 = arith.mulf %1, %6 : vector<8x256xf32>
    %c2 = arith.constant 2 : index
    %8 = memref.load %arg2[%c2] : memref<25xf32, #tpu.memory_space<smem>>
    %9 = vector.broadcast %8 : f32 to vector<8x256xf32>
    %10 = arith.mulf %1, %9 : vector<8x256xf32>
    %c3 = arith.constant 3 : index
    %11 = memref.load %arg2[%c3] : memref<25xf32, #tpu.memory_space<smem>>
    %12 = vector.broadcast %11 : f32 to vector<8x256xf32>
    %13 = arith.mulf %1, %12 : vector<8x256xf32>
    %c4 = arith.constant 4 : index
    %14 = memref.load %arg2[%c4] : memref<25xf32, #tpu.memory_space<smem>>
    %15 = vector.broadcast %14 : f32 to vector<8x256xf32>
    %16 = arith.mulf %1, %15 : vector<8x256xf32>
    %c1_3 = arith.constant 1 : index
    %c0_4 = arith.constant 0 : index
    %c0_5 = arith.constant 0 : index
    %17 = vector.load %arg1[%c1_3, %c0_4, %c0_5] : memref<5x8x256xf32, #tpu.memory_space<vmem>>, vector<1x8x256xf32>
    %18 = vector.shape_cast %17 : vector<1x8x256xf32> to vector<8x256xf32>
    %c5 = arith.constant 5 : index
    %19 = memref.load %arg2[%c5] : memref<25xf32, #tpu.memory_space<smem>>
    %20 = vector.broadcast %19 : f32 to vector<8x256xf32>
    %21 = arith.mulf %18, %20 : vector<8x256xf32>
    %22 = arith.addf %4, %21 : vector<8x256xf32>
    %c6 = arith.constant 6 : index
    %23 = memref.load %arg2[%c6] : memref<25xf32, #tpu.memory_space<smem>>
    %24 = vector.broadcast %23 : f32 to vector<8x256xf32>
    %25 = arith.mulf %18, %24 : vector<8x256xf32>
    %26 = arith.addf %7, %25 : vector<8x256xf32>
    %c7 = arith.constant 7 : index
    %27 = memref.load %arg2[%c7] : memref<25xf32, #tpu.memory_space<smem>>
    %28 = vector.broadcast %27 : f32 to vector<8x256xf32>
    %29 = arith.mulf %18, %28 : vector<8x256xf32>
    %30 = arith.addf %10, %29 : vector<8x256xf32>
    %c8 = arith.constant 8 : index
    %31 = memref.load %arg2[%c8] : memref<25xf32, #tpu.memory_space<smem>>
    %32 = vector.broadcast %31 : f32 to vector<8x256xf32>
    %33 = arith.mulf %18, %32 : vector<8x256xf32>
    %34 = arith.addf %13, %33 : vector<8x256xf32>
    %c9 = arith.constant 9 : index
    %35 = memref.load %arg2[%c9] : memref<25xf32, #tpu.memory_space<smem>>
    %36 = vector.broadcast %35 : f32 to vector<8x256xf32>
    %37 = arith.mulf %18, %36 : vector<8x256xf32>
    %38 = arith.addf %16, %37 : vector<8x256xf32>
    %c2_6 = arith.constant 2 : index
    %c0_7 = arith.constant 0 : index
    %c0_8 = arith.constant 0 : index
    %39 = vector.load %arg1[%c2_6, %c0_7, %c0_8] : memref<5x8x256xf32, #tpu.memory_space<vmem>>, vector<1x8x256xf32>
    %40 = vector.shape_cast %39 : vector<1x8x256xf32> to vector<8x256xf32>
    %c10 = arith.constant 10 : index
    %41 = memref.load %arg2[%c10] : memref<25xf32, #tpu.memory_space<smem>>
    %42 = vector.broadcast %41 : f32 to vector<8x256xf32>
    %43 = arith.mulf %40, %42 : vector<8x256xf32>
    %44 = arith.addf %22, %43 : vector<8x256xf32>
    %c11 = arith.constant 11 : index
    %45 = memref.load %arg2[%c11] : memref<25xf32, #tpu.memory_space<smem>>
    %46 = vector.broadcast %45 : f32 to vector<8x256xf32>
    %47 = arith.mulf %40, %46 : vector<8x256xf32>
    %48 = arith.addf %26, %47 : vector<8x256xf32>
    %c12 = arith.constant 12 : index
    %49 = memref.load %arg2[%c12] : memref<25xf32, #tpu.memory_space<smem>>
    %50 = vector.broadcast %49 : f32 to vector<8x256xf32>
    %51 = arith.mulf %40, %50 : vector<8x256xf32>
    %52 = arith.addf %30, %51 : vector<8x256xf32>
    %c13 = arith.constant 13 : index
    %53 = memref.load %arg2[%c13] : memref<25xf32, #tpu.memory_space<smem>>
    %54 = vector.broadcast %53 : f32 to vector<8x256xf32>
    %55 = arith.mulf %40, %54 : vector<8x256xf32>
    %56 = arith.addf %34, %55 : vector<8x256xf32>
    %c14 = arith.constant 14 : index
    %57 = memref.load %arg2[%c14] : memref<25xf32, #tpu.memory_space<smem>>
    %58 = vector.broadcast %57 : f32 to vector<8x256xf32>
    %59 = arith.mulf %40, %58 : vector<8x256xf32>
    %60 = arith.addf %38, %59 : vector<8x256xf32>
    %c3_9 = arith.constant 3 : index
    %c0_10 = arith.constant 0 : index
    %c0_11 = arith.constant 0 : index
    %61 = vector.load %arg1[%c3_9, %c0_10, %c0_11] : memref<5x8x256xf32, #tpu.memory_space<vmem>>, vector<1x8x256xf32>
    %62 = vector.shape_cast %61 : vector<1x8x256xf32> to vector<8x256xf32>
    %c15 = arith.constant 15 : index
    %63 = memref.load %arg2[%c15] : memref<25xf32, #tpu.memory_space<smem>>
    %64 = vector.broadcast %63 : f32 to vector<8x256xf32>
    %65 = arith.mulf %62, %64 : vector<8x256xf32>
    %66 = arith.addf %44, %65 : vector<8x256xf32>
    %c16 = arith.constant 16 : index
    %67 = memref.load %arg2[%c16] : memref<25xf32, #tpu.memory_space<smem>>
    %68 = vector.broadcast %67 : f32 to vector<8x256xf32>
    %69 = arith.mulf %62, %68 : vector<8x256xf32>
    %70 = arith.addf %48, %69 : vector<8x256xf32>
    %c17 = arith.constant 17 : index
    %71 = memref.load %arg2[%c17] : memref<25xf32, #tpu.memory_space<smem>>
    %72 = vector.broadcast %71 : f32 to vector<8x256xf32>
    %73 = arith.mulf %62, %72 : vector<8x256xf32>
    %74 = arith.addf %52, %73 : vector<8x256xf32>
    %c18 = arith.constant 18 : index
    %75 = memref.load %arg2[%c18] : memref<25xf32, #tpu.memory_space<smem>>
    %76 = vector.broadcast %75 : f32 to vector<8x256xf32>
    %77 = arith.mulf %62, %76 : vector<8x256xf32>
    %78 = arith.addf %56, %77 : vector<8x256xf32>
    %c19 = arith.constant 19 : index
    %79 = memref.load %arg2[%c19] : memref<25xf32, #tpu.memory_space<smem>>
    %80 = vector.broadcast %79 : f32 to vector<8x256xf32>
    %81 = arith.mulf %62, %80 : vector<8x256xf32>
    %82 = arith.addf %60, %81 : vector<8x256xf32>
    %c4_12 = arith.constant 4 : index
    %c0_13 = arith.constant 0 : index
    %c0_14 = arith.constant 0 : index
    %83 = vector.load %arg1[%c4_12, %c0_13, %c0_14] : memref<5x8x256xf32, #tpu.memory_space<vmem>>, vector<1x8x256xf32>
    %84 = vector.shape_cast %83 : vector<1x8x256xf32> to vector<8x256xf32>
    %c20 = arith.constant 20 : index
    %85 = memref.load %arg2[%c20] : memref<25xf32, #tpu.memory_space<smem>>
    %86 = vector.broadcast %85 : f32 to vector<8x256xf32>
    %87 = arith.mulf %84, %86 : vector<8x256xf32>
    %88 = arith.addf %66, %87 : vector<8x256xf32>
    %c21 = arith.constant 21 : index
    %89 = memref.load %arg2[%c21] : memref<25xf32, #tpu.memory_space<smem>>
    %90 = vector.broadcast %89 : f32 to vector<8x256xf32>
    %91 = arith.mulf %84, %90 : vector<8x256xf32>
    %92 = arith.addf %70, %91 : vector<8x256xf32>
    %c22 = arith.constant 22 : index
    %93 = memref.load %arg2[%c22] : memref<25xf32, #tpu.memory_space<smem>>
    %94 = vector.broadcast %93 : f32 to vector<8x256xf32>
    %95 = arith.mulf %84, %94 : vector<8x256xf32>
    %96 = arith.addf %74, %95 : vector<8x256xf32>
    %c23 = arith.constant 23 : index
    %97 = memref.load %arg2[%c23] : memref<25xf32, #tpu.memory_space<smem>>
    %98 = vector.broadcast %97 : f32 to vector<8x256xf32>
    %99 = arith.mulf %84, %98 : vector<8x256xf32>
    %100 = arith.addf %78, %99 : vector<8x256xf32>
    %c24 = arith.constant 24 : index
    %101 = memref.load %arg2[%c24] : memref<25xf32, #tpu.memory_space<smem>>
    %102 = vector.broadcast %101 : f32 to vector<8x256xf32>
    %103 = arith.mulf %84, %102 : vector<8x256xf32>
    %104 = arith.addf %82, %103 : vector<8x256xf32>
    %c255_i32 = arith.constant 255 : i32
    %105 = tpu.dynamic_rotate %92 by %c255_i32 dim 1 : vector<8x256xf32>, i32 -> vector<8x256xf32>
    %106 = arith.addf %88, %105 : vector<8x256xf32>
    %c254_i32 = arith.constant 254 : i32
    %107 = tpu.dynamic_rotate %96 by %c254_i32 dim 1 : vector<8x256xf32>, i32 -> vector<8x256xf32>
    %108 = arith.addf %106, %107 : vector<8x256xf32>
    %c253_i32 = arith.constant 253 : i32
    %109 = tpu.dynamic_rotate %100 by %c253_i32 dim 1 : vector<8x256xf32>, i32 -> vector<8x256xf32>
    %110 = arith.addf %108, %109 : vector<8x256xf32>
    %c252_i32 = arith.constant 252 : i32
    %111 = tpu.dynamic_rotate %104 by %c252_i32 dim 1 : vector<8x256xf32>, i32 -> vector<8x256xf32>
    %112 = arith.addf %110, %111 : vector<8x256xf32>
    %113 = math.tanh %112 : vector<8x256xf32>
    %c0_15 = arith.constant 0 : index
    %c0_16 = arith.constant 0 : index
    %114 = vector.load %arg3[%c0_15, %c0_16] : memref<256x256xf32, #tpu.memory_space<vmem>>, vector<256x256xf32>
    %cst = arith.constant dense<0.000000e+00> : vector<8x256xf32>
    %115 = tpu.matmul %113, %114, %cst {dimension_numbers = #tpu.dot_dimension_numbers<[1], [0], [0], [1], [0, 0, 1, 1], [], []>} : vector<8x256xf32>, vector<256x256xf32>, vector<8x256xf32> -> vector<8x256xf32>
    %c0_17 = arith.constant 0 : index
    %c0_18 = arith.constant 0 : index
    %116 = vector.load %arg4[%c0_17, %c0_18] : memref<1x256xf32, #tpu.memory_space<vmem>>, vector<1x256xf32>
    %117 = vector.broadcast %116 : vector<1x256xf32> to vector<8x256xf32>
    %118 = arith.addf %115, %117 : vector<8x256xf32>
    %c0_19 = arith.constant 0 : index
    %c0_20 = arith.constant 0 : index
    %119 = vector.load %arg5[%c0_19, %c0_20] : memref<8x256xf32, #tpu.memory_space<vmem>>, vector<8x256xf32>
    tpu.vector_store %arg5[%c0_19, %c0_20], %118 {strides = array<i32>} : memref<8x256xf32, #tpu.memory_space<vmem>>, vector<8x256xf32>,
    return
  }
  func.func @transform_0(%arg0: i32) -> (i32, i32, i32) {
    %c0_i32 = arith.constant 0 : i32
    %c0_i32_0 = arith.constant 0 : i32
    %c0_i32_1 = arith.constant 0 : i32
    return %c0_i32, %arg0, %c0_i32_0 : i32, i32, i32
  }
  func.func @transform_1(%arg0: i32) -> i32 {
    %c0_i32 = arith.constant 0 : i32
    %c0_i32_0 = arith.constant 0 : i32
    return %c0_i32 : i32
  }
  func.func @transform_2(%arg0: i32) -> (i32, i32) {
    %c0_i32 = arith.constant 0 : i32
    %c0_i32_0 = arith.constant 0 : i32
    %c0_i32_1 = arith.constant 0 : i32
    return %c0_i32, %c0_i32_0 : i32, i32
  }
  func.func @transform_3(%arg0: i32) -> (i32, i32) {
    %c0_i32 = arith.constant 0 : i32
    %c0_i32_0 = arith.constant 0 : i32
    %c0_i32_1 = arith.constant 0 : i32
    return %c0_i32, %c0_i32_0 : i32, i32
  }
  func.func @transform_4(%arg0: i32) -> (i32, i32) {
    %c0_i32 = arith.constant 0 : i32
    %c0_i32_0 = arith.constant 0 : i32
    return %arg0, %c0_i32 : i32, i32
  }
}

</mosaic_0001>

<llo_original>
// kernel: build_model_forward.2
$region0: #{build_model_forward.2}
  #allocation0 [shape = 'u32[]', space=smem, size = 0x4, offset = 0x4, fixed_abs, tag = 'smem constant byte address 0x4 - core index']
  #allocation1 [shape = 'u32[144,128]{1,0:T(1,128)}', space=vmem, size = 0x12000, scoped, tag = 'internal scratch']
  #allocation2 [shape = 'u32[2048]{0}', space=vmem, size = 0x2000, scoped, tag = 'scoped memory for build_model_forward.2']
  #allocation3 [shape = 'u32[2048]{0}', space=vmem, size = 0x2000, scoped, tag = 'scoped memory for build_model_forward.2']
  #allocation4 [shape = 'u32[2048]{0}', space=vmem, size = 0x2000, scoped, tag = 'scoped memory for build_model_forward.2']
  #allocation5 [shape = 'u32[2048]{0}', space=vmem, size = 0x2000, scoped, tag = 'scoped memory for build_model_forward.2']
  #allocation6 [shape = 'u32[2048]{0}', space=vmem, size = 0x2000, scoped, tag = 'scoped memory for build_model_forward.2']
  %s0 = inlined_call_operand.vmem [shape: f32[25], index: 0, kind: input, shape index: {}]
  %s1 = inlined_call_operand.vmem [shape: f32[256,256], index: 1, kind: input, shape index: {}]
  %s2 = inlined_call_operand.vmem [shape: f32[1,256], index: 2, kind: input, shape index: {}]
  %s3 = inlined_call_operand.vmem [shape: f32[5,2,200], index: 3, kind: input, shape index: {}]
  %s4 = inlined_call_operand.<no memory space> [shape: f32[], index: 4, kind: input, shape index: {}]
  %s5 = inlined_call_operand.vmem [shape: f32[8,256], index: 5, kind: output, shape index: {}]
  %s6 = sld [smem:[#allocation0]]
  $region30: #{build_model_forward.2} parent=0
    _
  %s8 = ssub.s32 1, %s6
  %s9 = scalar_select 0, %s8, %s6
  %v10 = vstv %s4
  $region1: #{build_model_forward.2} parent=0
    #allocation7 [shape = 'u8[512]{0}', space=smem, size = 0x200, scoped, tag = 'input window, operand 1, single buffered']
    #allocation8 [shape = 's32[1]{0}', space=sflag, size = 0x4, scoped, tag = 'scoped memory for build_model_forward.2']
    #allocation9 [shape = 'u8[40960]{0}', space=vmem, size = 0xa000, dematerialized = true, scoped, tag = 'FusionAdapter Buffer %fusion.1 = f32[5,8,256]{2,1,0:T(8,128)} fusion(%param_3.1, %param_4), kind=kLoop, calls=%fused_computation.1.clone, metadata={op_name="jit(build_model_forward)/jit(_pad)/pad" stack_frame_id=8}']
    %11 = vsyncpa [#allocation8], 0
    // Predicated region
    $region2: #{build_model_forward.2} parent=1 // pred_check
      _
    $region3: #{build_model_forward.2} parent=1 // pred_check_branch
      %13 = sbr.rel (0) target = $region5
    $region4: #{build_model_forward.2} parent=1 // pred_region
      %s14 = scalar_lea.vmem %s3, 4294967294
    $region5: #{build_model_forward.2} parent=1 // pred_fallthru
      _
    // Predicated region
    $region6: #{build_model_forward.2} parent=1 // pred_check
      _
    $region7: #{build_model_forward.2} parent=1 // pred_check_branch
      %16 = sbr.rel (0) target = $region9
    $region8: #{build_model_forward.2} parent=1 // pred_region
      %s18 = ssub.s32 16, 16
      %19 = vsyncadd [#allocation8], %s18
      %s21 = sshll.u32 %s0, 4
      %s22 = int_to_ptr.vmem [resolvable:$true] %s21
      %24 = dma.vmem_to_smem %s22, 16, [#allocation7], [#allocation8]
    $region9: #{build_model_forward.2} parent=1 // pred_fallthru
      _
    // Predicated region
    $region10: #{build_model_forward.2} parent=1 // pred_check
      _
    $region11: #{build_model_forward.2} parent=1 // pred_check_branch
      %26 = sbr.rel (0) target = $region13
    $region12: #{build_model_forward.2} parent=1 // pred_region
      _
    $region13: #{build_model_forward.2} parent=1 // pred_fallthru
      _
    // Predicated region
    $region14: #{build_model_forward.2} parent=1 // pred_check
      _
    $region15: #{build_model_forward.2} parent=1 // pred_check_branch
      %28 = sbr.rel (0) target = $region17
    $region16: #{build_model_forward.2} parent=1 // pred_region
      _
    $region17: #{build_model_forward.2} parent=1 // pred_fallthru
      _
    // Predicated region
    $region18: #{build_model_forward.2} parent=1 // pred_check
      _
    $region19: #{build_model_forward.2} parent=1 // pred_check_branch
      %30 = sbr.rel (0) target = $region21
    $region20: #{build_model_forward.2} parent=1 // pred_region
      %31 = dma.done [#allocation8], 16
    $region21: #{build_model_forward.2} parent=1 // pred_fallthru
      _
    %32 = sfence
    %s33 = scalar_lea.vmem %s3, 4294967294
    %s34 = scalar_lea.vmem %s3, 4294967294
    %s35 = scalar_lea.vmem %s34, 2
    %v36 = vld [vmem:[%s35] sm:$0x3]
    %v37 = vlaneseq
    %v38 = vshrl.u32 %v37, 7
    %vm40 = vcmp.lt.s32.totalorder %v38, 2
    %v41 = vsel %vm40, %v36, %v10
    %v42 = vlaneseq
    %v43 = vand.u32 %v42, 127
    %v44 = vadd.s32 %v43, 128
    %vm45 = vcmp.lt.s32.totalorder %v44, 328
    %v46 = vsel %vm45, %v41, %v10
    %v47 = vlaneseq
    %v48 = vand.u32 %v47, 127
    %vm49 = vcmp.lt.s32.totalorder %v48, 126
    %v50 = vsel %vm49, %v46, %v10
    %51 = vrot.lane.b32.xlu0 %v50, 2
    %v52 = vpop.permute.xlu0 %51
    %54 = vst [vmem:[#allocation9] sm:$0xff] %v52
    %s55 = scalar_lea.vmem %s34, 4
    %v56 = vld [vmem:[%s55] sm:$0x3]
    %v57 = vlaneseq
    %v58 = vshrl.u32 %v57, 7
    %vm60 = vcmp.lt.s32.totalorder %v58, 2
    %v61 = vsel %vm60, %v56, %v10
    %v62 = vlaneseq
    %v63 = vand.u32 %v62, 127
    %v64 = vadd.s32 %v63, 256
    %vm65 = vcmp.lt.s32.totalorder %v64, 328
    %v66 = vsel %vm65, %v61, %v10
    %v67 = vlaneseq
    %v68 = vand.u32 %v67, 127
    %vm69 = vcmp.lt.s32.totalorder %v68, 126
    %v70 = vsel %vm69, %v66, %v46
    %71 = vrot.lane.b32.xlu0 %v70, 2
    %v72 = vpop.permute.xlu0 %71
    %s73 = scalar_lea.vmem [#allocation9], 8
    %75 = vst [vmem:[%s73] sm:$0xff] %v72
    %s76 = scalar_lea.vmem %s34, 4
    %s77 = scalar_lea.vmem %s34, 6
    %v78 = vld [vmem:[%s77] sm:$0x3]
    %v79 = vlaneseq
    %v80 = vshrl.u32 %v79, 7
    %vm82 = vcmp.lt.s32.totalorder %v80, 2
    %v83 = vsel %vm82, %v78, %v10
    %v84 = vlaneseq
    %v85 = vand.u32 %v84, 127
    %v86 = vadd.s32 %v85, 128
    %vm87 = vcmp.lt.s32.totalorder %v86, 328
    %v88 = vsel %vm87, %v83, %v10
    %v89 = vlaneseq
    %v90 = vand.u32 %v89, 127
    %vm91 = vcmp.lt.s32.totalorder %v90, 126
    %v92 = vsel %vm91, %v88, %v10
    %93 = vrot.lane.b32.xlu0 %v92, 2
    %v94 = vpop.permute.xlu0 %93
    %s95 = scalar_lea.vmem [#allocation9], 16
    %97 = vst [vmem:[%s95] sm:$0xff] %v94
    %s98 = scalar_lea.vmem %s34, 8
    %v99 = vld [vmem:[%s98] sm:$0x3]
    %v100 = vlaneseq
    %v101 = vshrl.u32 %v100, 7
    %vm103 = vcmp.lt.s32.totalorder %v101, 2
    %v104 = vsel %vm103, %v99, %v10
    %v105 = vlaneseq
    %v106 = vand.u32 %v105, 127
    %v107 = vadd.s32 %v106, 256
    %vm108 = vcmp.lt.s32.totalorder %v107, 328
    %v109 = vsel %vm108, %v104, %v10
    %v110 = vlaneseq
    %v111 = vand.u32 %v110, 127
    %vm112 = vcmp.lt.s32.totalorder %v111, 126
    %v113 = vsel %vm112, %v109, %v88
    %114 = vrot.lane.b32.xlu0 %v113, 2
    %v115 = vpop.permute.xlu0 %114
    %s116 = scalar_lea.vmem [#allocation9], 24
    %118 = vst [vmem:[%s116] sm:$0xff] %v115
    %s119 = scalar_lea.vmem %s34, 8
    %s120 = scalar_lea.vmem %s34, 10
    %v121 = vld [vmem:[%s120] sm:$0x3]
    %v122 = vlaneseq
    %v123 = vshrl.u32 %v122, 7
    %vm125 = vcmp.lt.s32.totalorder %v123, 2
    %v126 = vsel %vm125, %v121, %v10
    %v127 = vlaneseq
    %v128 = vand.u32 %v127, 127
    %v129 = vadd.s32 %v128, 128
    %vm130 = vcmp.lt.s32.totalorder %v129, 328
    %v131 = vsel %vm130, %v126, %v10
    %v132 = vlaneseq
    %v133 = vand.u32 %v132, 127
    %vm134 = vcmp.lt.s32.totalorder %v133, 126
    %v135 = vsel %vm134, %v131, %v10
    %136 = vrot.lane.b32.xlu0 %v135, 2
    %v137 = vpop.permute.xlu0 %136
    %s138 = scalar_lea.vmem [#allocation9], 32
    %140 = vst [vmem:[%s138] sm:$0xff] %v137
    %s141 = scalar_lea.vmem %s34, 12
    %v142 = vld [vmem:[%s141] sm:$0x3]
    %v143 = vlaneseq
    %v144 = vshrl.u32 %v143, 7
    %vm146 = vcmp.lt.s32.totalorder %v144, 2
    %v147 = vsel %vm146, %v142, %v10
    %v148 = vlaneseq
    %v149 = vand.u32 %v148, 127
    %v150 = vadd.s32 %v149, 256
    %vm151 = vcmp.lt.s32.totalorder %v150, 328
    %v152 = vsel %vm151, %v147, %v10
    %v153 = vlaneseq
    %v154 = vand.u32 %v153, 127
    %vm155 = vcmp.lt.s32.totalorder %v154, 126
    %v156 = vsel %vm155, %v152, %v131
    %157 = vrot.lane.b32.xlu0 %v156, 2
    %v158 = vpop.permute.xlu0 %157
    %s159 = scalar_lea.vmem [#allocation9], 40
    %161 = vst [vmem:[%s159] sm:$0xff] %v158
    %s162 = scalar_lea.vmem %s34, 12
    %s163 = scalar_lea.vmem %s34, 14
    %v164 = vld [vmem:[%s163] sm:$0x3]
    %v165 = vlaneseq
    %v166 = vshrl.u32 %v165, 7
    %vm168 = vcmp.lt.s32.totalorder %v166, 2
    %v169 = vsel %vm168, %v164, %v10
    %v170 = vlaneseq
    %v171 = vand.u32 %v170, 127
    %v172 = vadd.s32 %v171, 128
    %vm173 = vcmp.lt.s32.totalorder %v172, 328
    %v174 = vsel %vm173, %v169, %v10
    %v175 = vlaneseq
    %v176 = vand.u32 %v175, 127
    %vm177 = vcmp.lt.s32.totalorder %v176, 126
    %v178 = vsel %vm177, %v174, %v10
    %179 = vrot.lane.b32.xlu0 %v178, 2
    %v180 = vpop.permute.xlu0 %179
    %s181 = scalar_lea.vmem [#allocation9], 48
    %183 = vst [vmem:[%s181] sm:$0xff] %v180
    %s184 = scalar_lea.vmem %s34, 16
    %v185 = vld [vmem:[%s184] sm:$0x3]
    %v186 = vlaneseq
    %v187 = vshrl.u32 %v186, 7
    %vm189 = vcmp.lt.s32.totalorder %v187, 2
    %v190 = vsel %vm189, %v185, %v10
    %v191 = vlaneseq
    %v192 = vand.u32 %v191, 127
    %v193 = vadd.s32 %v192, 256
    %vm194 = vcmp.lt.s32.totalorder %v193, 328
    %v195 = vsel %vm194, %v190, %v10
    %v196 = vlaneseq
    %v197 = vand.u32 %v196, 127
    %vm198 = vcmp.lt.s32.totalorder %v197, 126
    %v199 = vsel %vm198, %v195, %v174
    %200 = vrot.lane.b32.xlu0 %v199, 2
    %v201 = vpop.permute.xlu0 %200
    %s202 = scalar_lea.vmem [#allocation9], 56
    %204 = vst [vmem:[%s202] sm:$0xff] %v201
    %s205 = scalar_lea.vmem %s34, 16
    %s206 = scalar_lea.vmem %s34, 18
    %v207 = vld [vmem:[%s206] sm:$0x3]
    %v208 = vlaneseq
    %v209 = vshrl.u32 %v208, 7
    %vm211 = vcmp.lt.s32.totalorder %v209, 2
    %v212 = vsel %vm211, %v207, %v10
    %v213 = vlaneseq
    %v214 = vand.u32 %v213, 127
    %v215 = vadd.s32 %v214, 128
    %vm216 = vcmp.lt.s32.totalorder %v215, 328
    %v217 = vsel %vm216, %v212, %v10
    %v218 = vlaneseq
    %v219 = vand.u32 %v218, 127
    %vm220 = vcmp.lt.s32.totalorder %v219, 126
    %v221 = vsel %vm220, %v217, %v10
    %222 = vrot.lane.b32.xlu0 %v221, 2
    %v223 = vpop.permute.xlu0 %222
    %s224 = scalar_lea.vmem [#allocation9], 64
    %226 = vst [vmem:[%s224] sm:$0xff] %v223
    %s227 = scalar_lea.vmem %s34, 20
    %v228 = vld [vmem:[%s227] sm:$0x3]
    %v229 = vlaneseq
    %v230 = vshrl.u32 %v229, 7
    %vm232 = vcmp.lt.s32.totalorder %v230, 2
    %v233 = vsel %vm232, %v228, %v10
    %v234 = vlaneseq
    %v235 = vand.u32 %v234, 127
    %v236 = vadd.s32 %v235, 256
    %vm237 = vcmp.lt.s32.totalorder %v236, 328
    %v238 = vsel %vm237, %v233, %v10
    %v239 = vlaneseq
    %v240 = vand.u32 %v239, 127
    %vm241 = vcmp.lt.s32.totalorder %v240, 126
    %v242 = vsel %vm241, %v238, %v217
    %243 = vrot.lane.b32.xlu0 %v242, 2
    %v244 = vpop.permute.xlu0 %243
    %s245 = scalar_lea.vmem [#allocation9], 72
    %247 = vst [vmem:[%s245] sm:$0xff] %v244
    %v248 = vld [vmem:[#allocation9] sm:$0xff]
    %v249 = vld [vmem:[#allocation9 + $0x8] sm:$0xff]
    %s250 = sld [smem:[#allocation7]]
    %v251 = vstv %s250
    %v252 = vmul.f32 %v248, %v251
    %v253 = vmul.f32 %v249, %v251
    %s254 = sld [smem:[#allocation7 + $0x1]]
    %v255 = vstv %s254
    %v256 = vmul.f32 %v248, %v255
    %v257 = vmul.f32 %v249, %v255
    %s258 = sld [smem:[#allocation7 + $0x2]]
    %v259 = vstv %s258
    %v260 = vmul.f32 %v248, %v259
    %v261 = vmul.f32 %v249, %v259
    %s262 = sld [smem:[#allocation7 + $0x3]]
    %v263 = vstv %s262
    %v264 = vmul.f32 %v248, %v263
    %v265 = vmul.f32 %v249, %v263
    %s266 = sld [smem:[#allocation7 + $0x4]]
    %v267 = vstv %s266
    %v268 = vmul.f32 %v248, %v267
    %v269 = vmul.f32 %v249, %v267
    %s270 = scalar_lea.vmem [#allocation9], 16
    %v271 = vld [vmem:[%s270] sm:$0xff]
    %v272 = vld [vmem:[%s270 + $0x8] sm:$0xff]
    %s273 = sld [smem:[#allocation7 + $0x5]]
    %v274 = vstv %s273
    %v275 = vmul.f32 %v271, %v274
    %v276 = vmul.f32 %v272, %v274
    %v277 = vadd.f32 %v252, %v275
    %v278 = vadd.f32 %v253, %v276
    %s279 = sld [smem:[#allocation7 + $0x6]]
    %v280 = vstv %s279
    %v281 = vmul.f32 %v271, %v280
    %v282 = vmul.f32 %v272, %v280
    %v283 = vadd.f32 %v256, %v281
    %v284 = vadd.f32 %v257, %v282
    %s285 = sld [smem:[#allocation7 + $0x7]]
    %v286 = vstv %s285
    %v287 = vmul.f32 %v271, %v286
    %v288 = vmul.f32 %v272, %v286
    %v289 = vadd.f32 %v260, %v287
    %v290 = vadd.f32 %v261, %v288
    %s291 = sld [smem:[#allocation7 + $0x8]]
    %v292 = vstv %s291
    %v293 = vmul.f32 %v271, %v292
    %v294 = vmul.f32 %v272, %v292
    %v295 = vadd.f32 %v264, %v293
    %v296 = vadd.f32 %v265, %v294
    %s297 = sld [smem:[#allocation7 + $0x9]]
    %v298 = vstv %s297
    %v299 = vmul.f32 %v271, %v298
    %v300 = vmul.f32 %v272, %v298
    %v301 = vadd.f32 %v268, %v299
    %v302 = vadd.f32 %v269, %v300
    %s303 = scalar_lea.vmem [#allocation9], 32
    %v304 = vld [vmem:[%s303] sm:$0xff]
    %v305 = vld [vmem:[%s303 + $0x8] sm:$0xff]
    %s306 = sld [smem:[#allocation7 + $0xa]]
    %v307 = vstv %s306
    %v308 = vmul.f32 %v304, %v307
    %v309 = vmul.f32 %v305, %v307
    %v310 = vadd.f32 %v277, %v308
    %v311 = vadd.f32 %v278, %v309
    %s312 = sld [smem:[#allocation7 + $0xb]]
    %v313 = vstv %s312
    %v314 = vmul.f32 %v304, %v313
    %v315 = vmul.f32 %v305, %v313
    %v316 = vadd.f32 %v283, %v314
    %v317 = vadd.f32 %v284, %v315
    %s318 = sld [smem:[#allocation7 + $0xc]]
    %v319 = vstv %s318
    %v320 = vmul.f32 %v304, %v319
    %v321 = vmul.f32 %v305, %v319
    %v322 = vadd.f32 %v289, %v320
    %v323 = vadd.f32 %v290, %v321
    %s324 = sld [smem:[#allocation7 + $0xd]]
    %v325 = vstv %s324
    %v326 = vmul.f32 %v304, %v325
    %v327 = vmul.f32 %v305, %v325
    %v328 = vadd.f32 %v295, %v326
    %v329 = vadd.f32 %v296, %v327
    %s330 = sld [smem:[#allocation7 + $0xe]]
    %v331 = vstv %s330
    %v332 = vmul.f32 %v304, %v331
    %v333 = vmul.f32 %v305, %v331
    %v334 = vadd.f32 %v301, %v332
    %v335 = vadd.f32 %v302, %v333
    %s336 = scalar_lea.vmem [#allocation9], 48
    %v337 = vld [vmem:[%s336] sm:$0xff]
    %v338 = vld [vmem:[%s336 + $0x8] sm:$0xff]
    %s339 = sld [smem:[#allocation7 + $0xf]]
    %v340 = vstv %s339
    %v341 = vmul.f32 %v337, %v340
    %v342 = vmul.f32 %v338, %v340
    %v343 = vadd.f32 %v310, %v341
    %v344 = vadd.f32 %v311, %v342
    %s345 = sld [smem:[#allocation7 + $0x10]]
    %v346 = vstv %s345
    %v347 = vmul.f32 %v337, %v346
    %v348 = vmul.f32 %v338, %v346
    %v349 = vadd.f32 %v316, %v347
    %v350 = vadd.f32 %v317, %v348
    %s351 = sld [smem:[#allocation7 + $0x11]]
    %v352 = vstv %s351
    %v353 = vmul.f32 %v337, %v352
    %v354 = vmul.f32 %v338, %v352
    %v355 = vadd.f32 %v322, %v353
    %v356 = vadd.f32 %v323, %v354
    %s357 = sld [smem:[#allocation7 + $0x12]]
    %v358 = vstv %s357
    %v359 = vmul.f32 %v337, %v358
    %v360 = vmul.f32 %v338, %v358
    %v361 = vadd.f32 %v328, %v359
    %v362 = vadd.f32 %v329, %v360
    %s363 = sld [smem:[#allocation7 + $0x13]]
    %v364 = vstv %s363
    %v365 = vmul.f32 %v337, %v364
    %v366 = vmul.f32 %v338, %v364
    %v367 = vadd.f32 %v334, %v365
    %v368 = vadd.f32 %v335, %v366
    %s369 = scalar_lea.vmem [#allocation9], 64
    %v370 = vld [vmem:[%s369] sm:$0xff]
    %v371 = vld [vmem:[%s369 + $0x8] sm:$0xff]
    %s372 = sld [smem:[#allocation7 + $0x14]]
    %v373 = vstv %s372
    %v374 = vmul.f32 %v370, %v373
    %v375 = vmul.f32 %v371, %v373
    %v376 = vadd.f32 %v343, %v374
    %v377 = vadd.f32 %v344, %v375
    %s378 = sld [smem:[#allocation7 + $0x15]]
    %v379 = vstv %s378
    %v380 = vmul.f32 %v370, %v379
    %v381 = vmul.f32 %v371, %v379
    %v382 = vadd.f32 %v349, %v380
    %v383 = vadd.f32 %v350, %v381
    %s384 = sld [smem:[#allocation7 + $0x16]]
    %v385 = vstv %s384
    %v386 = vmul.f32 %v370, %v385
    %v387 = vmul.f32 %v371, %v385
    %v388 = vadd.f32 %v355, %v386
    %v389 = vadd.f32 %v356, %v387
    %s390 = sld [smem:[#allocation7 + $0x17]]
    %v391 = vstv %s390
    %v392 = vmul.f32 %v370, %v391
    %v393 = vmul.f32 %v371, %v391
    %v394 = vadd.f32 %v361, %v392
    %v395 = vadd.f32 %v362, %v393
    %s396 = sld [smem:[#allocation7 + $0x18]]
    %v397 = vstv %s396
    %v398 = vmul.f32 %v370, %v397
    %v399 = vmul.f32 %v371, %v397
    %v400 = vadd.f32 %v367, %v398
    %v401 = vadd.f32 %v368, %v399
    %402 = vrot.lane.b32.xlu0 %v382, 127
    %v403 = vpop.permute.xlu0 %402
    %404 = vrot.lane.b32.xlu0 %v383, 127
    %v405 = vpop.permute.xlu0 %404
    %v406 = vlaneseq
    %v407 = vand.u32 %v406, 127
    %vm408 = vcmp.lt.s32.totalorder %v407, 127
    %v409 = vsel %vm408, %v403, %v405
    %v410 = vsel %vm408, %v405, %v403
    %v411 = vadd.f32 %v376, %v409
    %v412 = vadd.f32 %v377, %v410
    %413 = vrot.lane.b32.xlu0 %v388, 126
    %v414 = vpop.permute.xlu0 %413
    %415 = vrot.lane.b32.xlu0 %v389, 126
    %v416 = vpop.permute.xlu0 %415
    %vm417 = vcmp.lt.s32.totalorder %v407, 126
    %v418 = vsel %vm417, %v414, %v416
    %v419 = vsel %vm417, %v416, %v414
    %v420 = vadd.f32 %v411, %v418
    %v421 = vadd.f32 %v412, %v419
    %422 = vrot.lane.b32.xlu0 %v394, 125
    %v423 = vpop.permute.xlu0 %422
    %424 = vrot.lane.b32.xlu0 %v395, 125
    %v425 = vpop.permute.xlu0 %424
    %vm426 = vcmp.lt.s32.totalorder %v407, 125
    %v427 = vsel %vm426, %v423, %v425
    %v428 = vsel %vm426, %v425, %v423
    %v429 = vadd.f32 %v420, %v427
    %v430 = vadd.f32 %v421, %v428
    %431 = vrot.lane.b32.xlu0 %v400, 124
    %v432 = vpop.permute.xlu0 %431
    %433 = vrot.lane.b32.xlu0 %v401, 124
    %v434 = vpop.permute.xlu0 %433
    %vm435 = vcmp.lt.s32.totalorder %v407, 124
    %v436 = vsel %vm435, %v432, %v434
    %v437 = vsel %vm435, %v434, %v432
    %v438 = vadd.f32 %v429, %v436
    %v439 = vadd.f32 %v430, %v437
    %v440 = vtanh.pop %v438
    %v441 = vtanh.pop %v439
    %v442 = vld [vmem:[%s1] sm:$0xff]
    %v443 = vld [vmem:[%s1 + $0x8] sm:$0xff]
    %v444 = vld [vmem:[%s1 + $0x10] sm:$0xff]
    %v445 = vld [vmem:[%s1 + $0x18] sm:$0xff]
    %v446 = vld [vmem:[%s1 + $0x20] sm:$0xff]
    %v447 = vld [vmem:[%s1 + $0x28] sm:$0xff]
    %v448 = vld [vmem:[%s1 + $0x30] sm:$0xff]
    %v449 = vld [vmem:[%s1 + $0x38] sm:$0xff]
    %v450 = vld [vmem:[%s1 + $0x40] sm:$0xff]
    %v451 = vld [vmem:[%s1 + $0x48] sm:$0xff]
    %v452 = vld [vmem:[%s1 + $0x50] sm:$0xff]
    %v453 = vld [vmem:[%s1 + $0x58] sm:$0xff]
    %v454 = vld [vmem:[%s1 + $0x60] sm:$0xff]
    %v455 = vld [vmem:[%s1 + $0x68] sm:$0xff]
    %v456 = vld [vmem:[%s1 + $0x70] sm:$0xff]
    %v457 = vld [vmem:[%s1 + $0x78] sm:$0xff]
    %v458 = vld [vmem:[%s1 + $0x80] sm:$0xff]
    %v459 = vld [vmem:[%s1 + $0x88] sm:$0xff]
    %v460 = vld [vmem:[%s1 + $0x90] sm:$0xff]
    %v461 = vld [vmem:[%s1 + $0x98] sm:$0xff]
    %v462 = vld [vmem:[%s1 + $0xa0] sm:$0xff]
    %v463 = vld [vmem:[%s1 + $0xa8] sm:$0xff]
    %v464 = vld [vmem:[%s1 + $0xb0] sm:$0xff]
    %v465 = vld [vmem:[%s1 + $0xb8] sm:$0xff]
    %v466 = vld [vmem:[%s1 + $0xc0] sm:$0xff]
    %v467 = vld [vmem:[%s1 + $0xc8] sm:$0xff]
    %v468 = vld [vmem:[%s1 + $0xd0] sm:$0xff]
    %v469 = vld [vmem:[%s1 + $0xd8] sm:$0xff]
    %v470 = vld [vmem:[%s1 + $0xe0] sm:$0xff]
    %v471 = vld [vmem:[%s1 + $0xe8] sm:$0xff]
    %v472 = vld [vmem:[%s1 + $0xf0] sm:$0xff]
    %v473 = vld [vmem:[%s1 + $0xf8] sm:$0xff]
    %v474 = vld [vmem:[%s1 + $0x100] sm:$0xff]
    %v475 = vld [vmem:[%s1 + $0x108] sm:$0xff]
    %v476 = vld [vmem:[%s1 + $0x110] sm:$0xff]
    %v477 = vld [vmem:[%s1 + $0x118] sm:$0xff]
    %v478 = vld [vmem:[%s1 + $0x120] sm:$0xff]
    %v479 = vld [vmem:[%s1 + $0x128] sm:$0xff]
    %v480 = vld [vmem:[%s1 + $0x130] sm:$0xff]
    %v481 = vld [vmem:[%s1 + $0x138] sm:$0xff]
    %v482 = vld [vmem:[%s1 + $0x140] sm:$0xff]
    %v483 = vld [vmem:[%s1 + $0x148] sm:$0xff]
    %v484 = vld [vmem:[%s1 + $0x150] sm:$0xff]
    %v485 = vld [vmem:[%s1 + $0x158] sm:$0xff]
    %v486 = vld [vmem:[%s1 + $0x160] sm:$0xff]
    %v487 = vld [vmem:[%s1 + $0x168] sm:$0xff]
    %v488 = vld [vmem:[%s1 + $0x170] sm:$0xff]
    %v489 = vld [vmem:[%s1 + $0x178] sm:$0xff]
    %v490 = vld [vmem:[%s1 + $0x180] sm:$0xff]
    %v491 = vld [vmem:[%s1 + $0x188] sm:$0xff]
    %v492 = vld [vmem:[%s1 + $0x190] sm:$0xff]
    %v493 = vld [vmem:[%s1 + $0x198] sm:$0xff]
    %v494 = vld [vmem:[%s1 + $0x1a0] sm:$0xff]
    %v495 = vld [vmem:[%s1 + $0x1a8] sm:$0xff]
    %v496 = vld [vmem:[%s1 + $0x1b0] sm:$0xff]
    %v497 = vld [vmem:[%s1 + $0x1b8] sm:$0xff]
    %v498 = vld [vmem:[%s1 + $0x1c0] sm:$0xff]
    %v499 = vld [vmem:[%s1 + $0x1c8] sm:$0xff]
    %v500 = vld [vmem:[%s1 + $0x1d0] sm:$0xff]
    %v501 = vld [vmem:[%s1 + $0x1d8] sm:$0xff]
    %v502 = vld [vmem:[%s1 + $0x1e0] sm:$0xff]
    %v503 = vld [vmem:[%s1 + $0x1e8] sm:$0xff]
    %v504 = vld [vmem:[%s1 + $0x1f0] sm:$0xff]
    %v505 = vld [vmem:[%s1 + $0x1f8] sm:$0xff]
    %v506 = vld [vmem:[%s2] sm:$0x3]
    %v508 = vlaneseq
    %v509 = vshrl.u32 %v508, 7
    %v510 = vsub.s32 0, %v509
    %v511 = vrot.slane %v506, %v510
    %v512 = vlaneseq
    %v513 = vshrl.u32 %v512, 7
    %v514 = vsub.s32 1, %v513
    %v515 = vrot.slane %v506, %v514
    %518 = vmatprep.subr.mxu0 %v443
    %519 = vmatpush1.msra.mxu0 %v442
    %520 = vmatprep.subr.mxu0 %v445
    %521 = vmatpush1.msra.mxu0 %v444
    %522 = vmatprep.subr.mxu0 %v447
    %523 = vmatpush1.msra.mxu0 %v446
    %524 = vmatprep.subr.mxu0 %v449
    %525 = vmatpush1.msra.mxu0 %v448
    %526 = vmatprep.subr.mxu0 %v451
    %527 = vmatpush1.msra.mxu0 %v450
    %528 = vmatprep.subr.mxu0 %v453
    %529 = vmatpush1.msra.mxu0 %v452
    %530 = vmatprep.subr.mxu0 %v455
    %531 = vmatpush1.msra.mxu0 %v454
    %532 = vmatprep.subr.mxu0 %v457
    %533 = vmatpush1.msra.mxu0 %v456
    %534 = vmatprep.subr.mxu0 %v459
    %535 = vmatpush1.msra.mxu0 %v458
    %536 = vmatprep.subr.mxu0 %v461
    %537 = vmatpush1.msra.mxu0 %v460
    %538 = vmatprep.subr.mxu0 %v463
    %539 = vmatpush1.msra.mxu0 %v462
    %540 = vmatprep.subr.mxu0 %v465
    %541 = vmatpush1.msra.mxu0 %v464
    %542 = vmatprep.subr.mxu0 %v467
    %543 = vmatpush1.msra.mxu0 %v466
    %544 = vmatprep.subr.mxu0 %v469
    %545 = vmatpush1.msra.mxu0 %v468
    %546 = vmatprep.subr.mxu0 %v471
    %547 = vmatpush1.msra.mxu0 %v470
    %548 = vmatprep.subr.mxu0 %v473
    %549 = vmatpush1.msra.mxu0 %v472
    %550 = vmatprep.subr.mxu0 %v475
    %551 = vmatpush1.msra.mxu0 %v474
    %552 = vmatprep.subr.mxu0 %v477
    %553 = vmatpush1.msra.mxu0 %v476
    %554 = vmatprep.subr.mxu0 %v479
    %555 = vmatpush1.msra.mxu0 %v478
    %556 = vmatprep.subr.mxu0 %v481
    %557 = vmatpush1.msra.mxu0 %v480
    %558 = vmatprep.subr.mxu0 %v483
    %559 = vmatpush1.msra.mxu0 %v482
    %560 = vmatprep.subr.mxu0 %v485
    %561 = vmatpush1.msra.mxu0 %v484
    %562 = vmatprep.subr.mxu0 %v487
    %563 = vmatpush1.msra.mxu0 %v486
    %564 = vmatprep.subr.mxu0 %v489
    %565 = vmatpush1.msra.mxu0 %v488
    %566 = vmatprep.subr.mxu0 %v491
    %567 = vmatpush1.msra.mxu0 %v490
    %568 = vmatprep.subr.mxu0 %v493
    %569 = vmatpush1.msra.mxu0 %v492
    %570 = vmatprep.subr.mxu0 %v495
    %571 = vmatpush1.msra.mxu0 %v494
    %572 = vmatprep.subr.mxu0 %v497
    %573 = vmatpush1.msra.mxu0 %v496
    %574 = vmatprep.subr.mxu0 %v499
    %575 = vmatpush1.msra.mxu0 %v498
    %576 = vmatprep.subr.mxu0 %v501
    %577 = vmatpush1.msra.mxu0 %v500
    %578 = vmatprep.subr.mxu0 %v503
    %579 = vmatpush1.msra.mxu0 %v502
    %580 = vmatprep.subr.mxu0 %v505
    %581 = vmatpush1.msra.mxu0 %v504
    %582 = vmatprep.mubr.f32.mxu0 %v441
    %583 = vmatmul.mubr.f32.gmra.mrb[0].mxu0 %v440
    %v584 = vpop.f32.mrb[0].mxu0
    %v585 = vadd.f32 %v511, %v584
    %v586 = vpop.f32.mrb[0].mxu0
    %v587 = vadd.f32 %v515, %v586
    %588 = vdwg.mxu0
    %589 = vst [vmem:[%s5] sm:$0xff] %v585
    %590 = vst [vmem:[%s5 + $0x8] sm:$0xff] %v587
    // Predicated region
    $region22: #{build_model_forward.2} parent=1 // pred_check
      _
    $region23: #{build_model_forward.2} parent=1 // pred_check_branch
      %592 = sbr.rel (0) target = $region25
    $region24: #{build_model_forward.2} parent=1 // pred_region
      _
    $region25: #{build_model_forward.2} parent=1 // pred_fallthru
      _
    // Predicated region
    $region26: #{build_model_forward.2} parent=1 // pred_check
      _
    $region27: #{build_model_forward.2} parent=1 // pred_check_branch
      %594 = sbr.rel (0) target = $region29
    $region28: #{build_model_forward.2} parent=1 // pred_region
      _
    $region29: #{build_model_forward.2} parent=1 // pred_fallthru
      _
    %595 = vsyncpa [#allocation8], 1

</llo_original>
